<compile_context>
chip_gen: v5e
topology: v5e:2x2
jax: 0.10.0
libtpu: 0.0.40
codegen_flags: <defaults>
</compile_context>

<pallas_src>
import numpy as np
import jax
import jax.numpy as jnp
from jax import lax
from jax.experimental import pallas as pl
from jax.experimental.pallas import tpu as pltpu

# ---------------- problem configuration (small, consistent with the module) ----------------
N, C_IN, H, W = 2, 4, 16, 16
C_OUT = 4
GROUP_WIDTH = 2
RATES = (1, 2)
GROUPS = C_OUT // GROUP_WIDTH          # = 2
CIN_G = C_IN // GROUPS                 # = 2
COUT_G = C_OUT // GROUPS               # = 2
PAD = max(RATES)                       # pad once with max rate; per-rate offsets in im2col
BN_EPS = 1e-5


def _has_multiple_tensorcores() -> bool:
    """Heuristic: v7x exposes 2 TensorCores per chip; v5e/v6e have 1."""
    try:
        kind = jax.devices()[0].device_kind.lower()
    except Exception:
        return False
    return ("v7" in kind) or ("7x" in kind)


# ---------------------------------- Pallas kernel ----------------------------------
def _make_kernel(n_rates: int, bblk: int):
    def kernel(p_ref, w_ref, b_ref, o_ref):
        # p_ref: (bblk, R, 9*Cin, H*W)   im2col patches, spatial minor (lane-dense)
        # w_ref: (R, Cout, 9*Cin)        per-rate weights with BN scale folded in
        # b_ref: (R, Cout, 1)            folded BN bias
        # o_ref: (bblk, Cout, H*W)       lane-dense output (reshaped to NCHW outside)
        for bi in range(bblk):
            out = None
            for r in range(n_rates):
                acc = lax.dot_general(
                    w_ref[r, :, :], p_ref[bi, r, :, :],
                    dimension_numbers=(((1,), (0,)), ((), ())),
                    preferred_element_type=jnp.float32)            # (Cout, H*W)
                y = jnp.maximum(acc + b_ref[r, :, :], 0.0)          # bias + ReLU per branch
                out = y if out is None else out + y                 # sum of branches
            o_ref[bi, :, :] = out.astype(o_ref.dtype)
    return kernel


def _atrous_sum_pallas(patches, w_mat, bias):
    """patches: (N, R, 9*Cin, H*W); w_mat: (R, Cout, 9*Cin); bias: (R, Cout, 1)."""
    n, nr, kr, hw = patches.shape
    c_out = w_mat.shape[1]

    multi_core = _has_multiple_tensorcores()
    bblk = 1 if multi_core else n          # v7x: 1 elem/step across 2 TCs; v5e/v6e: whole batch
    grid = (n // bblk,)
    sem = ("parallel",) if multi_core else ("arbitrary",)

    return pl.pallas_call(
        _make_kernel(nr, bblk),
        out_shape=jax.ShapeDtypeStruct((n, c_out, hw), jnp.float32),
        grid_spec=pltpu.PrefetchScalarGridSpec(
            num_scalar_prefetch=0,
            grid=grid,
            in_specs=[
                pl.BlockSpec((bblk, nr, kr, hw), lambda b: (b, 0, 0, 0)),
                pl.BlockSpec((nr, c_out, kr), lambda b: (0, 0, 0)),
                pl.BlockSpec((nr, c_out, 1), lambda b: (0, 0, 0)),
            ],
            out_specs=pl.BlockSpec((bblk, c_out, hw), lambda b: (b, 0, 0)),
        ),
        compiler_params=pltpu.CompilerParams(dimension_semantics=sem),
    )(patches, w_mat, bias)


# ---------------------------------- glue (XLA-side prep) ----------------------------------
def _im2col(x_nchw, rates, pad):
    """(N, Cin, H, W) -> (N, R, 9*Cin, H*W) dilated patches, spatial minor."""
    n, cin, h, w = x_nchw.shape
    xp = jnp.pad(x_nchw, ((0, 0), (0, 0), (pad, pad), (pad, pad)))
    per_rate = []
    for rate in rates:
        taps = []
        for ky in range(3):
            for kx in range(3):
                oy = pad + rate * (ky - 1)
                ox = pad + rate * (kx - 1)
                taps.append(xp[:, :, oy:oy + h, ox:ox + w])        # (N, Cin, H, W)
        per_rate.append(jnp.stack(taps, axis=1))                    # (N, 9, Cin, H, W)
    p = jnp.stack(per_rate, axis=1)                                 # (N, R, 9, Cin, H, W)
    return p.reshape(n, len(rates), 9 * cin, h * w)


def _fold_weights(w_groups, bn_scale, bn_bias):
    """Block-diagonal grouped weights -> (R, Cout, 9*Cin) with BN scale folded; bias (R, Cout, 1)."""
    nr = w_groups.shape[0]
    w_full = jnp.zeros((nr, 3, 3, C_IN, C_OUT), jnp.float32)
    for r in range(nr):
        for g in range(GROUPS):
            w_full = w_full.at[
                r, :, :, g * CIN_G:(g + 1) * CIN_G, g * COUT_G:(g + 1) * COUT_G
            ].set(w_groups[r, g])
    w_full = w_full * bn_scale[:, None, None, None, :]              # fold BN scale (exact, eval mode)
    # (R, 3, 3, Cin, Cout) -> (R, Cout, ky, kx, Cin) -> (R, Cout, 9*Cin); matches im2col order
    w_mat = jnp.transpose(w_full, (0, 4, 1, 2, 3)).reshape(nr, C_OUT, 9 * C_IN)
    bias = bn_bias.reshape(nr, C_OUT, 1)
    return w_mat, bias


def atrous_sum(x_nchw, w_groups, bn_scale, bn_bias):
    """Full forward: NCHW in, NCHW out (like the PyTorch module in eval mode)."""
    n, _, h, w = x_nchw.shape
    patches = _im2col(x_nchw, RATES, PAD)
    w_mat, bias = _fold_weights(w_groups, bn_scale, bn_bias)
    out = _atrous_sum_pallas(patches, w_mat, bias)                  # (N, Cout, H*W)
    return out.reshape(n, C_OUT, h, w)


# ---------------------------------- pure-JAX reference ----------------------------------
def reference_nhwc(x_nhwc, w_groups, gamma, beta, run_mean, run_var):
    """Matches the PyTorch forward with BatchNorm in eval mode."""
    out = None
    for r_idx, rate in enumerate(RATES):
        k_hwio = jnp.concatenate([w_groups[r_idx, g] for g in range(GROUPS)], axis=-1)
        y = lax.conv_general_dilated(
            x_nhwc, k_hwio,
            window_strides=(1, 1),
            padding=[(rate, rate), (rate, rate)],
            rhs_dilation=(rate, rate),
            dimension_numbers=("NHWC", "HWIO", "NHWC"),
            feature_group_count=GROUPS)
        scale = gamma[r_idx] / jnp.sqrt(run_var[r_idx] + BN_EPS)
        bias = beta[r_idx] - run_mean[r_idx] * scale
        y = jnp.maximum(y * scale + bias, 0.0)
        out = y if out is None else out + y
    return out


if __name__ == "__main__":
    key = jax.random.PRNGKey(0)
    k_x, k_w, k_g, k_b, k_m, k_v = jax.random.split(key, 6)

    # input in PyTorch-native NCHW
    x_nchw = jax.random.normal(k_x, (N, C_IN, H, W), jnp.float32)

    # grouped conv weights per rate/group: (R, G, 3, 3, Cin_g, Cout_g)
    w_groups = 0.2 * jax.random.normal(
        k_w, (len(RATES), GROUPS, 3, 3, CIN_G, COUT_G), jnp.float32)

    # BatchNorm (eval-mode) parameters per rate
    gamma = 0.5 + jax.random.uniform(k_g, (len(RATES), C_OUT), jnp.float32)
    beta = 0.1 * jax.random.normal(k_b, (len(RATES), C_OUT), jnp.float32)
    run_mean = 0.1 * jax.random.normal(k_m, (len(RATES), C_OUT), jnp.float32)
    run_var = 0.5 + jax.random.uniform(k_v, (len(RATES), C_OUT), jnp.float32)

    bn_scale = gamma / jnp.sqrt(run_var + BN_EPS)
    bn_bias = beta - run_mean * bn_scale

    out = atrous_sum(x_nchw, w_groups, bn_scale, bn_bias)
    out = jax.block_until_ready(out)

    ref = reference_nhwc(jnp.transpose(x_nchw, (0, 2, 3, 1)),
                         w_groups, gamma, beta, run_mean, run_var)
    ref_nchw = jnp.transpose(ref, (0, 3, 1, 2))
    np.testing.assert_allclose(np.asarray(out), np.asarray(ref_nchw), rtol=1e-4, atol=1e-4)

    # TODO(synk): at production shapes, tile H*W with a 2*PAD halo and budget for v7x's
    # 64 MiB VMEM instead of whole-image blocks; optionally cast to bf16 for MXU inputs.
    print("KERNEL_OK")
</pallas_src>

<mosaic_0001>
module attributes {stable_mosaic.version = 11 : i64} {
  func.func @kernel(%arg0: i32, %arg1: memref<2x2x36x256xf32, #tpu.memory_space<vmem>>, %arg2: memref<2x4x36xf32, #tpu.memory_space<vmem>>, %arg3: memref<2x4x1xf32, #tpu.memory_space<vmem>>, %arg4: memref<2x4x256xf32, #tpu.memory_space<vmem>>) attributes {dimension_semantics = [#tpu.dimension_semantics<arbitrary>], iteration_bounds = array<i64: 1>, scalar_prefetch = 0 : i64, scratch_operands = 0 : i64, tpu.core_type = #tpu.core_type<tc>, window_params = [{transform_indices = @transform_0, window_bounds = array<i64: 2, 2, 36, 256>}, {pipeline_mode = #tpu.pipeline_mode<synchronous>, transform_indices = @transform_1, window_bounds = array<i64: 2, 4, 36>}, {pipeline_mode = #tpu.pipeline_mode<synchronous>, transform_indices = @transform_2, window_bounds = array<i64: 2, 4, 1>}, {transform_indices = @transform_3, window_bounds = array<i64: 2, 4, 256>}]} {
    %c0 = arith.constant 0 : index
    %c0_0 = arith.constant 0 : index
    %c0_1 = arith.constant 0 : index
    %0 = vector.load %arg2[%c0, %c0_0, %c0_1] : memref<2x4x36xf32, #tpu.memory_space<vmem>>, vector<1x4x36xf32>
    %1 = vector.shape_cast %0 : vector<1x4x36xf32> to vector<4x36xf32>
    %c0_2 = arith.constant 0 : index
    %c0_3 = arith.constant 0 : index
    %c0_4 = arith.constant 0 : index
    %c0_5 = arith.constant 0 : index
    %2 = vector.load %arg1[%c0_2, %c0_3, %c0_4, %c0_5] : memref<2x2x36x256xf32, #tpu.memory_space<vmem>>, vector<1x1x36x256xf32>
    %3 = vector.shape_cast %2 : vector<1x1x36x256xf32> to vector<36x256xf32>
    %cst = arith.constant dense<0.000000e+00> : vector<4x256xf32>
    %4 = tpu.matmul %1, %3, %cst {dimension_numbers = #tpu.dot_dimension_numbers<[1], [0], [0], [1], [0, 0, 1, 1], [], []>} : vector<4x36xf32>, vector<36x256xf32>, vector<4x256xf32> -> vector<4x256xf32>
    %c0_6 = arith.constant 0 : index
    %c0_7 = arith.constant 0 : index
    %c0_8 = arith.constant 0 : index
    %5 = vector.load %arg3[%c0_6, %c0_7, %c0_8] : memref<2x4x1xf32, #tpu.memory_space<vmem>>, vector<1x4x1xf32>
    %6 = vector.shape_cast %5 : vector<1x4x1xf32> to vector<4x1xf32>
    %7 = vector.broadcast %6 : vector<4x1xf32> to vector<4x256xf32>
    %8 = arith.addf %4, %7 : vector<4x256xf32>
    %cst_9 = arith.constant 0.000000e+00 : f32
    %9 = vector.broadcast %cst_9 : f32 to vector<4x256xf32>
    %10 = arith.maximumf %8, %9 : vector<4x256xf32>
    %c1 = arith.constant 1 : index
    %c0_10 = arith.constant 0 : index
    %c0_11 = arith.constant 0 : index
    %11 = vector.load %arg2[%c1, %c0_10, %c0_11] : memref<2x4x36xf32, #tpu.memory_space<vmem>>, vector<1x4x36xf32>
    %12 = vector.shape_cast %11 : vector<1x4x36xf32> to vector<4x36xf32>
    %c0_12 = arith.constant 0 : index
    %c1_13 = arith.constant 1 : index
    %c0_14 = arith.constant 0 : index
    %c0_15 = arith.constant 0 : index
    %13 = vector.load %arg1[%c0_12, %c1_13, %c0_14, %c0_15] : memref<2x2x36x256xf32, #tpu.memory_space<vmem>>, vector<1x1x36x256xf32>
    %14 = vector.shape_cast %13 : vector<1x1x36x256xf32> to vector<36x256xf32>
    %cst_16 = arith.constant dense<0.000000e+00> : vector<4x256xf32>
    %15 = tpu.matmul %12, %14, %cst_16 {dimension_numbers = #tpu.dot_dimension_numbers<[1], [0], [0], [1], [0, 0, 1, 1], [], []>} : vector<4x36xf32>, vector<36x256xf32>, vector<4x256xf32> -> vector<4x256xf32>
    %c1_17 = arith.constant 1 : index
    %c0_18 = arith.constant 0 : index
    %c0_19 = arith.constant 0 : index
    %16 = vector.load %arg3[%c1_17, %c0_18, %c0_19] : memref<2x4x1xf32, #tpu.memory_space<vmem>>, vector<1x4x1xf32>
    %17 = vector.shape_cast %16 : vector<1x4x1xf32> to vector<4x1xf32>
    %18 = vector.broadcast %17 : vector<4x1xf32> to vector<4x256xf32>
    %19 = arith.addf %15, %18 : vector<4x256xf32>
    %cst_20 = arith.constant 0.000000e+00 : f32
    %20 = vector.broadcast %cst_20 : f32 to vector<4x256xf32>
    %21 = arith.maximumf %19, %20 : vector<4x256xf32>
    %22 = arith.addf %10, %21 : vector<4x256xf32>
    %c0_21 = arith.constant 0 : index
    %c0_22 = arith.constant 0 : index
    %c0_23 = arith.constant 0 : index
    %23 = vector.load %arg4[%c0_21, %c0_22, %c0_23] : memref<2x4x256xf32, #tpu.memory_space<vmem>>, vector<1x4x256xf32>
    %24 = vector.shape_cast %23 : vector<1x4x256xf32> to vector<4x256xf32>
    %25 = vector.shape_cast %22 : vector<4x256xf32> to vector<1x4x256xf32>
    tpu.vector_store %arg4[%c0_21, %c0_22, %c0_23], %25 {strides = array<i32>} : memref<2x4x256xf32, #tpu.memory_space<vmem>>, vector<1x4x256xf32>,
    %c0_24 = arith.constant 0 : index
    %c0_25 = arith.constant 0 : index
    %c0_26 = arith.constant 0 : index
    %26 = vector.load %arg2[%c0_24, %c0_25, %c0_26] : memref<2x4x36xf32, #tpu.memory_space<vmem>>, vector<1x4x36xf32>
    %27 = vector.shape_cast %26 : vector<1x4x36xf32> to vector<4x36xf32>
    %c1_27 = arith.constant 1 : index
    %c0_28 = arith.constant 0 : index
    %c0_29 = arith.constant 0 : index
    %c0_30 = arith.constant 0 : index
    %28 = vector.load %arg1[%c1_27, %c0_28, %c0_29, %c0_30] : memref<2x2x36x256xf32, #tpu.memory_space<vmem>>, vector<1x1x36x256xf32>
    %29 = vector.shape_cast %28 : vector<1x1x36x256xf32> to vector<36x256xf32>
    %cst_31 = arith.constant dense<0.000000e+00> : vector<4x256xf32>
    %30 = tpu.matmul %27, %29, %cst_31 {dimension_numbers = #tpu.dot_dimension_numbers<[1], [0], [0], [1], [0, 0, 1, 1], [], []>} : vector<4x36xf32>, vector<36x256xf32>, vector<4x256xf32> -> vector<4x256xf32>
    %c0_32 = arith.constant 0 : index
    %c0_33 = arith.constant 0 : index
    %c0_34 = arith.constant 0 : index
    %31 = vector.load %arg3[%c0_32, %c0_33, %c0_34] : memref<2x4x1xf32, #tpu.memory_space<vmem>>, vector<1x4x1xf32>
    %32 = vector.shape_cast %31 : vector<1x4x1xf32> to vector<4x1xf32>
    %33 = vector.broadcast %32 : vector<4x1xf32> to vector<4x256xf32>
    %34 = arith.addf %30, %33 : vector<4x256xf32>
    %cst_35 = arith.constant 0.000000e+00 : f32
    %35 = vector.broadcast %cst_35 : f32 to vector<4x256xf32>
    %36 = arith.maximumf %34, %35 : vector<4x256xf32>
    %c1_36 = arith.constant 1 : index
    %c0_37 = arith.constant 0 : index
    %c0_38 = arith.constant 0 : index
    %37 = vector.load %arg2[%c1_36, %c0_37, %c0_38] : memref<2x4x36xf32, #tpu.memory_space<vmem>>, vector<1x4x36xf32>
    %38 = vector.shape_cast %37 : vector<1x4x36xf32> to vector<4x36xf32>
    %c1_39 = arith.constant 1 : index
    %c1_40 = arith.constant 1 : index
    %c0_41 = arith.constant 0 : index
    %c0_42 = arith.constant 0 : index
    %39 = vector.load %arg1[%c1_39, %c1_40, %c0_41, %c0_42] : memref<2x2x36x256xf32, #tpu.memory_space<vmem>>, vector<1x1x36x256xf32>
    %40 = vector.shape_cast %39 : vector<1x1x36x256xf32> to vector<36x256xf32>
    %cst_43 = arith.constant dense<0.000000e+00> : vector<4x256xf32>
    %41 = tpu.matmul %38, %40, %cst_43 {dimension_numbers = #tpu.dot_dimension_numbers<[1], [0], [0], [1], [0, 0, 1, 1], [], []>} : vector<4x36xf32>, vector<36x256xf32>, vector<4x256xf32> -> vector<4x256xf32>
    %c1_44 = arith.constant 1 : index
    %c0_45 = arith.constant 0 : index
    %c0_46 = arith.constant 0 : index
    %42 = vector.load %arg3[%c1_44, %c0_45, %c0_46] : memref<2x4x1xf32, #tpu.memory_space<vmem>>, vector<1x4x1xf32>
    %43 = vector.shape_cast %42 : vector<1x4x1xf32> to vector<4x1xf32>
    %44 = vector.broadcast %43 : vector<4x1xf32> to vector<4x256xf32>
    %45 = arith.addf %41, %44 : vector<4x256xf32>
    %cst_47 = arith.constant 0.000000e+00 : f32
    %46 = vector.broadcast %cst_47 : f32 to vector<4x256xf32>
    %47 = arith.maximumf %45, %46 : vector<4x256xf32>
    %48 = arith.addf %36, %47 : vector<4x256xf32>
    %c1_48 = arith.constant 1 : index
    %c0_49 = arith.constant 0 : index
    %c0_50 = arith.constant 0 : index
    %49 = vector.load %arg4[%c1_48, %c0_49, %c0_50] : memref<2x4x256xf32, #tpu.memory_space<vmem>>, vector<1x4x256xf32>
    %50 = vector.shape_cast %49 : vector<1x4x256xf32> to vector<4x256xf32>
    %51 = vector.shape_cast %48 : vector<4x256xf32> to vector<1x4x256xf32>
    tpu.vector_store %arg4[%c1_48, %c0_49, %c0_50], %51 {strides = array<i32>} : memref<2x4x256xf32, #tpu.memory_space<vmem>>, vector<1x4x256xf32>,
    return
  }
  func.func @transform_0(%arg0: i32) -> (i32, i32, i32, i32) {
    %c0_i32 = arith.constant 0 : i32
    %c0_i32_0 = arith.constant 0 : i32
    %c0_i32_1 = arith.constant 0 : i32
    %c0_i32_2 = arith.constant 0 : i32
    return %arg0, %c0_i32, %c0_i32_0, %c0_i32_1 : i32, i32, i32, i32
  }
  func.func @transform_1(%arg0: i32) -> (i32, i32, i32) {
    %c0_i32 = arith.constant 0 : i32
    %c0_i32_0 = arith.constant 0 : i32
    %c0_i32_1 = arith.constant 0 : i32
    %c0_i32_2 = arith.constant 0 : i32
    return %c0_i32, %c0_i32_0, %c0_i32_1 : i32, i32, i32
  }
  func.func @transform_2(%arg0: i32) -> (i32, i32, i32) {
    %c0_i32 = arith.constant 0 : i32
    %c0_i32_0 = arith.constant 0 : i32
    %c0_i32_1 = arith.constant 0 : i32
    %c0_i32_2 = arith.constant 0 : i32
    return %c0_i32, %c0_i32_0, %c0_i32_1 : i32, i32, i32
  }
  func.func @transform_3(%arg0: i32) -> (i32, i32, i32) {
    %c0_i32 = arith.constant 0 : i32
    %c0_i32_0 = arith.constant 0 : i32
    %c0_i32_1 = arith.constant 0 : i32
    return %arg0, %c0_i32, %c0_i32_0 : i32, i32, i32
  }
}

</mosaic_0001>

<llo_original>
// kernel: tpu_custom_call.1
$region0: #{tpu_custom_call.1}
  #allocation0 [shape = 'u32[]', space=smem, size = 0x4, offset = 0x4, fixed_abs, tag = 'smem constant byte address 0x4 - core index']
  #allocation1 [shape = 'u32[72,128]{1,0:T(1,128)}', space=vmem, size = 0x9000, scoped, tag = 'internal scratch']
  %s0 = inlined_call_operand.vmem [shape: f32[2,2,36,256], index: 0, kind: input, shape index: {}]
  %s1 = inlined_call_operand.vmem [shape: f32[2,4,36], index: 1, kind: input, shape index: {}]
  %s2 = inlined_call_operand.vmem [shape: f32[2,4,1], index: 2, kind: input, shape index: {}]
  %s3 = inlined_call_operand.hbm [shape: f32[2,4,256], index: 3, kind: output, shape index: {}]
  %s4 = sld [smem:[#allocation0]]
  $region22: #{tpu_custom_call.1} parent=0
    _
  %s6 = ssub.s32 1, %s4
  %s7 = scalar_select 0, %s6, %s4
  $region1: #{tpu_custom_call.1} parent=0
    #allocation2 [shape = 'u8[8192]{0}', space=vmem, size = 0x2000, scoped, tag = 'output window, operand 0, single buffered']
    #allocation3 [shape = 's32[1]{0}', space=sflag, size = 0x4, scoped, tag = 'scoped memory for tpu_custom_call.1']
    %8 = vsyncpa [#allocation3], 0
    // Predicated region
    $region2: #{tpu_custom_call.1} parent=1 // pred_check
      _
    $region3: #{tpu_custom_call.1} parent=1 // pred_check_branch
      %10 = sbr.rel (0) target = $region5
    $region4: #{tpu_custom_call.1} parent=1 // pred_region
      _
    $region5: #{tpu_custom_call.1} parent=1 // pred_fallthru
      _
    // Predicated region
    $region6: #{tpu_custom_call.1} parent=1 // pred_check
      _
    $region7: #{tpu_custom_call.1} parent=1 // pred_check_branch
      %12 = sbr.rel (0) target = $region9
    $region8: #{tpu_custom_call.1} parent=1 // pred_region
      _
    $region9: #{tpu_custom_call.1} parent=1 // pred_fallthru
      _
    // Predicated region
    $region10: #{tpu_custom_call.1} parent=1 // pred_check
      _
    $region11: #{tpu_custom_call.1} parent=1 // pred_check_branch
      %14 = sbr.rel (0) target = $region13
    $region12: #{tpu_custom_call.1} parent=1 // pred_region
      _
    $region13: #{tpu_custom_call.1} parent=1 // pred_fallthru
      _
    %v15 = vld [vmem:[%s1] sm:$0xf]
    %v16 = vld [vmem:[%s0] sm:$0xff]
    %v17 = vld [vmem:[%s0 + $0x8] sm:$0xff]
    %v18 = vld [vmem:[%s0 + $0x10] sm:$0xff]
    %v19 = vld [vmem:[%s0 + $0x18] sm:$0xff]
    %v20 = vld [vmem:[%s0 + $0x20] sm:$0xff]
    %v21 = vld [vmem:[%s0 + $0x28] sm:$0xff]
    %v22 = vld [vmem:[%s0 + $0x30] sm:$0xff]
    %v23 = vld [vmem:[%s0 + $0x38] sm:$0xff]
    %v24 = vld [vmem:[%s0 + $0x40] sm:$0xf]
    %v25 = vld [vmem:[%s0 + $0x48] sm:$0xf]
    %v26 = vld [vmem:[%s2] sm:$0xf]
    %28 = vset.pattern.permute.xlu0 0
    %29 = vperm.xlu0 %28, %v26
    %v30 = vpop.permute.xlu0 %29
    %vm32 = vcmask 293888
    %v34 = vsel %vm32, %v15, 0
    %vm36 = vcmask 1043456
    %v38 = vsel %vm36, %v24, 0
    %v41 = vsel %vm36, %v25, 0
    %43 = vmatpush.msra.mxu0 0.0
    %44 = vmatpush.msra.mxu0 0.0
    %45 = vmatpush.msra.mxu0 0.0
    %46 = vmatpush.msra.mxu0 0.0
    %47 = vmatpush.msra.mxu0 0.0
    %48 = vmatpush.msra.mxu0 0.0
    %49 = vmatpush.msra.mxu0 0.0
    %50 = vmatpush.msra.mxu0 0.0
    %51 = vmatpush.msra.mxu0 0.0
    %52 = vmatpush.msra.mxu0 0.0
    %53 = vmatpush.msra.mxu0 0.0
    %54 = vmatpush.msra.mxu0 %v38
    %55 = vmatpush.msra.mxu0 %v22
    %56 = vmatpush.msra.mxu0 %v20
    %57 = vmatpush.msra.mxu0 %v18
    %58 = vmatpush.msra.mxu0 %v16
    %59 = vmatmul.f32.gmra.mxu0 %v34
    %v60 = vpop.f32.mrf.mxu0
    %v61 = vadd.f32 %v30, %v60
    %62 = vdwg.mxu0
    %63 = vmatpush.msra.mxu0 0.0
    %64 = vmatpush.msra.mxu0 0.0
    %65 = vmatpush.msra.mxu0 0.0
    %66 = vmatpush.msra.mxu0 0.0
    %67 = vmatpush.msra.mxu0 0.0
    %68 = vmatpush.msra.mxu0 0.0
    %69 = vmatpush.msra.mxu0 0.0
    %70 = vmatpush.msra.mxu0 0.0
    %71 = vmatpush.msra.mxu0 0.0
    %72 = vmatpush.msra.mxu0 0.0
    %73 = vmatpush.msra.mxu0 0.0
    %74 = vmatpush.msra.mxu0 %v41
    %75 = vmatpush.msra.mxu0 %v23
    %76 = vmatpush.msra.mxu0 %v21
    %77 = vmatpush.msra.mxu0 %v19
    %78 = vmatpush.msra.mxu0 %v17
    %79 = vmatmul.f32.gmra.mxu0 %v34
    %v80 = vpop.f32.mrf.mxu0
    %v81 = vadd.f32 %v30, %v80
    %82 = vdwg.mxu0
    %v83 = vmax.f32 %v61, 0.0
    %v84 = vmax.f32 %v81, 0.0
    %s85 = scalar_lea.vmem %s1, 4
    %v86 = vld [vmem:[%s85] sm:$0xf]
    %s87 = scalar_lea.vmem %s0, 80
    %v88 = vld [vmem:[%s87] sm:$0xff]
    %v89 = vld [vmem:[%s87 + $0x8] sm:$0xff]
    %v90 = vld [vmem:[%s87 + $0x10] sm:$0xff]
    %v91 = vld [vmem:[%s87 + $0x18] sm:$0xff]
    %v92 = vld [vmem:[%s87 + $0x20] sm:$0xff]
    %v93 = vld [vmem:[%s87 + $0x28] sm:$0xff]
    %v94 = vld [vmem:[%s87 + $0x30] sm:$0xff]
    %v95 = vld [vmem:[%s87 + $0x38] sm:$0xff]
    %v96 = vld [vmem:[%s87 + $0x40] sm:$0xf]
    %v97 = vld [vmem:[%s87 + $0x48] sm:$0xf]
    %s98 = scalar_lea.vmem %s2, 4
    %v99 = vld [vmem:[%s98] sm:$0xf]
    %101 = vset.pattern.permute.xlu0 0
    %102 = vperm.xlu0 %101, %v99
    %v103 = vpop.permute.xlu0 %102
    %v106 = vsel %vm32, %v86, 0
    %v109 = vsel %vm36, %v96, 0
    %v112 = vsel %vm36, %v97, 0
    %114 = vmatpush.msra.mxu0 0.0
    %115 = vmatpush.msra.mxu0 0.0
    %116 = vmatpush.msra.mxu0 0.0
    %117 = vmatpush.msra.mxu0 0.0
    %118 = vmatpush.msra.mxu0 0.0
    %119 = vmatpush.msra.mxu0 0.0
    %120 = vmatpush.msra.mxu0 0.0
    %121 = vmatpush.msra.mxu0 0.0
    %122 = vmatpush.msra.mxu0 0.0
    %123 = vmatpush.msra.mxu0 0.0
    %124 = vmatpush.msra.mxu0 0.0
    %125 = vmatpush.msra.mxu0 %v109
    %126 = vmatpush.msra.mxu0 %v94
    %127 = vmatpush.msra.mxu0 %v92
    %128 = vmatpush.msra.mxu0 %v90
    %129 = vmatpush.msra.mxu0 %v88
    %130 = vmatmul.f32.gmra.mxu0 %v106
    %v131 = vpop.f32.mrf.mxu0
    %v132 = vadd.f32 %v103, %v131
    %133 = vdwg.mxu0
    %134 = vmatpush.msra.mxu0 0.0
    %135 = vmatpush.msra.mxu0 0.0
    %136 = vmatpush.msra.mxu0 0.0
    %137 = vmatpush.msra.mxu0 0.0
    %138 = vmatpush.msra.mxu0 0.0
    %139 = vmatpush.msra.mxu0 0.0
    %140 = vmatpush.msra.mxu0 0.0
    %141 = vmatpush.msra.mxu0 0.0
    %142 = vmatpush.msra.mxu0 0.0
    %143 = vmatpush.msra.mxu0 0.0
    %144 = vmatpush.msra.mxu0 0.0
    %145 = vmatpush.msra.mxu0 %v112
    %146 = vmatpush.msra.mxu0 %v95
    %147 = vmatpush.msra.mxu0 %v93
    %148 = vmatpush.msra.mxu0 %v91
    %149 = vmatpush.msra.mxu0 %v89
    %150 = vmatmul.f32.gmra.mxu0 %v106
    %v151 = vpop.f32.mrf.mxu0
    %v152 = vadd.f32 %v103, %v151
    %153 = vdwg.mxu0
    %v154 = vmax.f32 %v132, 0.0
    %v155 = vmax.f32 %v152, 0.0
    %v156 = vadd.f32 %v83, %v154
    %v157 = vadd.f32 %v84, %v155
    %v160 = vrot.slane %v157, 4
    %v161 = vsel %vm36, %v156, %v160
    %163 = vst [vmem:[#allocation2] sm:$0xff] %v161
    %v164 = vld [vmem:[%s1] sm:$0xf]
    %s165 = scalar_lea.vmem %s0, 160
    %v166 = vld [vmem:[%s165] sm:$0xff]
    %v167 = vld [vmem:[%s165 + $0x8] sm:$0xff]
    %v168 = vld [vmem:[%s165 + $0x10] sm:$0xff]
    %v169 = vld [vmem:[%s165 + $0x18] sm:$0xff]
    %v170 = vld [vmem:[%s165 + $0x20] sm:$0xff]
    %v171 = vld [vmem:[%s165 + $0x28] sm:$0xff]
    %v172 = vld [vmem:[%s165 + $0x30] sm:$0xff]
    %v173 = vld [vmem:[%s165 + $0x38] sm:$0xff]
    %v174 = vld [vmem:[%s165 + $0x40] sm:$0xf]
    %v175 = vld [vmem:[%s165 + $0x48] sm:$0xf]
    %v176 = vld [vmem:[%s2] sm:$0xf]
    %178 = vset.pattern.permute.xlu0 0
    %179 = vperm.xlu0 %178, %v176
    %v180 = vpop.permute.xlu0 %179
    %v183 = vsel %vm32, %v164, 0
    %v186 = vsel %vm36, %v174, 0
    %v189 = vsel %vm36, %v175, 0
    %191 = vmatpush.msra.mxu0 0.0
    %192 = vmatpush.msra.mxu0 0.0
    %193 = vmatpush.msra.mxu0 0.0
    %194 = vmatpush.msra.mxu0 0.0
    %195 = vmatpush.msra.mxu0 0.0
    %196 = vmatpush.msra.mxu0 0.0
    %197 = vmatpush.msra.mxu0 0.0
    %198 = vmatpush.msra.mxu0 0.0
    %199 = vmatpush.msra.mxu0 0.0
    %200 = vmatpush.msra.mxu0 0.0
    %201 = vmatpush.msra.mxu0 0.0
    %202 = vmatpush.msra.mxu0 %v186
    %203 = vmatpush.msra.mxu0 %v172
    %204 = vmatpush.msra.mxu0 %v170
    %205 = vmatpush.msra.mxu0 %v168
    %206 = vmatpush.msra.mxu0 %v166
    %207 = vmatmul.f32.gmra.mxu0 %v183
    %v208 = vpop.f32.mrf.mxu0
    %v209 = vadd.f32 %v180, %v208
    %210 = vdwg.mxu0
    %211 = vmatpush.msra.mxu0 0.0
    %212 = vmatpush.msra.mxu0 0.0
    %213 = vmatpush.msra.mxu0 0.0
    %214 = vmatpush.msra.mxu0 0.0
    %215 = vmatpush.msra.mxu0 0.0
    %216 = vmatpush.msra.mxu0 0.0
    %217 = vmatpush.msra.mxu0 0.0
    %218 = vmatpush.msra.mxu0 0.0
    %219 = vmatpush.msra.mxu0 0.0
    %220 = vmatpush.msra.mxu0 0.0
    %221 = vmatpush.msra.mxu0 0.0
    %222 = vmatpush.msra.mxu0 %v189
    %223 = vmatpush.msra.mxu0 %v173
    %224 = vmatpush.msra.mxu0 %v171
    %225 = vmatpush.msra.mxu0 %v169
    %226 = vmatpush.msra.mxu0 %v167
    %227 = vmatmul.f32.gmra.mxu0 %v183
    %v228 = vpop.f32.mrf.mxu0
    %v229 = vadd.f32 %v180, %v228
    %230 = vdwg.mxu0
    %v231 = vmax.f32 %v209, 0.0
    %v232 = vmax.f32 %v229, 0.0
    %v233 = vld [vmem:[%s85] sm:$0xf]
    %s234 = scalar_lea.vmem %s0, 240
    %v235 = vld [vmem:[%s234] sm:$0xff]
    %v236 = vld [vmem:[%s234 + $0x8] sm:$0xff]
    %v237 = vld [vmem:[%s234 + $0x10] sm:$0xff]
    %v238 = vld [vmem:[%s234 + $0x18] sm:$0xff]
    %v239 = vld [vmem:[%s234 + $0x20] sm:$0xff]
    %v240 = vld [vmem:[%s234 + $0x28] sm:$0xff]
    %v241 = vld [vmem:[%s234 + $0x30] sm:$0xff]
    %v242 = vld [vmem:[%s234 + $0x38] sm:$0xff]
    %v243 = vld [vmem:[%s234 + $0x40] sm:$0xf]
    %v244 = vld [vmem:[%s234 + $0x48] sm:$0xf]
    %v245 = vld [vmem:[%s98] sm:$0xf]
    %247 = vset.pattern.permute.xlu0 0
    %248 = vperm.xlu0 %247, %v245
    %v249 = vpop.permute.xlu0 %248
    %v252 = vsel %vm32, %v233, 0
    %v255 = vsel %vm36, %v243, 0
    %v258 = vsel %vm36, %v244, 0
    %260 = vmatpush.msra.mxu0 0.0
    %261 = vmatpush.msra.mxu0 0.0
    %262 = vmatpush.msra.mxu0 0.0
    %263 = vmatpush.msra.mxu0 0.0
    %264 = vmatpush.msra.mxu0 0.0
    %265 = vmatpush.msra.mxu0 0.0
    %266 = vmatpush.msra.mxu0 0.0
    %267 = vmatpush.msra.mxu0 0.0
    %268 = vmatpush.msra.mxu0 0.0
    %269 = vmatpush.msra.mxu0 0.0
    %270 = vmatpush.msra.mxu0 0.0
    %271 = vmatpush.msra.mxu0 %v255
    %272 = vmatpush.msra.mxu0 %v241
    %273 = vmatpush.msra.mxu0 %v239
    %274 = vmatpush.msra.mxu0 %v237
    %275 = vmatpush.msra.mxu0 %v235
    %276 = vmatmul.f32.gmra.mxu0 %v252
    %v277 = vpop.f32.mrf.mxu0
    %v278 = vadd.f32 %v249, %v277
    %279 = vdwg.mxu0
    %280 = vmatpush.msra.mxu0 0.0
    %281 = vmatpush.msra.mxu0 0.0
    %282 = vmatpush.msra.mxu0 0.0
    %283 = vmatpush.msra.mxu0 0.0
    %284 = vmatpush.msra.mxu0 0.0
    %285 = vmatpush.msra.mxu0 0.0
    %286 = vmatpush.msra.mxu0 0.0
    %287 = vmatpush.msra.mxu0 0.0
    %288 = vmatpush.msra.mxu0 0.0
    %289 = vmatpush.msra.mxu0 0.0
    %290 = vmatpush.msra.mxu0 0.0
    %291 = vmatpush.msra.mxu0 %v258
    %292 = vmatpush.msra.mxu0 %v242
    %293 = vmatpush.msra.mxu0 %v240
    %294 = vmatpush.msra.mxu0 %v238
    %295 = vmatpush.msra.mxu0 %v236
    %296 = vmatmul.f32.gmra.mxu0 %v252
    %v297 = vpop.f32.mrf.mxu0
    %v298 = vadd.f32 %v249, %v297
    %299 = vdwg.mxu0
    %v300 = vmax.f32 %v278, 0.0
    %v301 = vmax.f32 %v298, 0.0
    %v302 = vadd.f32 %v231, %v300
    %v303 = vadd.f32 %v232, %v301
    %v306 = vrot.slane %v303, 4
    %v307 = vsel %vm36, %v302, %v306
    %s309 = scalar_lea.vmem [#allocation2], 8
    %310 = vst [vmem:[%s309] sm:$0xff] %v307
    // Predicated region
    $region14: #{tpu_custom_call.1} parent=1 // pred_check
      _
    $region15: #{tpu_custom_call.1} parent=1 // pred_check_branch
      %312 = sbr.rel (0) target = $region17
    $region16: #{tpu_custom_call.1} parent=1 // pred_region
      %314 = vsyncadd [#allocation3], 0
      %s315 = sshll.u32 [#allocation2], 4
      %s316 = int_to_ptr.vmem [resolvable:$true] %s315
      %s317 = sshll.u32 %s3, 4
      %s318 = int_to_ptr.hbm [resolvable:$true] %s317
      %323 = dma.vmem_to_hbm [thread:$0]  %s316, 256, %s318, [#allocation3], 128, 128, 8
    $region17: #{tpu_custom_call.1} parent=1 // pred_fallthru
      _
    // Predicated region
    $region18: #{tpu_custom_call.1} parent=1 // pred_check
      _
    $region19: #{tpu_custom_call.1} parent=1 // pred_check_branch
      %325 = sbr.rel (0) target = $region21
    $region20: #{tpu_custom_call.1} parent=1 // pred_region
      %327 = dma.done [#allocation3], 256
    $region21: #{tpu_custom_call.1} parent=1 // pred_fallthru
      _
    %328 = vsyncpa [#allocation3], 1

</llo_original>
